<compile_context>
chip_gen: v6e
topology: v6e:2x2x1
jax: 0.10.0
libtpu: 0.0.40
codegen_flags: <defaults>
</compile_context>

<pallas_src>
import functools
import numpy as np
import jax
import jax.numpy as jnp
from jax.experimental import pallas as pl
from jax.experimental.pallas import tpu as pltpu


def _ceil_div(a, b):
    return -(-a // b)


def _interp_matrix(n_out: int, n_in: int) -> np.ndarray:
    """Dense 1-D bilinear (align_corners=True) interpolation matrix (n_out, n_in)."""
    if n_out == 1:
        src = np.zeros((1,), dtype=np.float64)
    else:
        src = np.arange(n_out, dtype=np.float64) * (n_in - 1) / (n_out - 1)
    i0 = np.clip(np.floor(src).astype(np.int64), 0, n_in - 1)
    i1 = np.minimum(i0 + 1, n_in - 1)
    w1 = (src - i0).astype(np.float32)
    w0 = 1.0 - w1
    M = np.zeros((n_out, n_in), dtype=np.float32)
    np.add.at(M, (np.arange(n_out), i0), w0)
    np.add.at(M, (np.arange(n_out), i1), w1)
    return M


def _vmem_capacity_bytes() -> int:
    """Physical VMEM capacity of the current part; conservative default on failure."""
    try:
        info = pltpu.get_tpu_info()
        for name in ("vmem_capacity_bytes", "vmem_size_bytes", "vmem_bytes"):
            v = getattr(info, name, None)
            if v:
                return int(v)
    except Exception:
        pass
    return 64 * 1024 * 1024  # conservative (v7x-class) default


def _plan_tiling(H, W, C, Hi, Wi, x_itemsize, mm_itemsize):
    """Generation-aware h-tile / VMEM plan.  Returns (Ht, Hp, n_t, hoist, vmem_limit)."""
    cap = _vmem_capacity_bytes()
    if cap <= 64 * 1024 * 1024:        # v7x-class: 64 MiB physical per TensorCore
        scoped = 40 * 1024 * 1024
    else:                              # v5e / v6e: 128 MiB physical
        scoped = 96 * 1024 * 1024

    sub = 16 if mm_itemsize < 4 else 8          # sublane multiple for the h-tile

    x_blk = 2 * C * Hi * Wi * x_itemsize        # resident logits block (double buffered)
    bt_blk = 2 * Wi * W * mm_itemsize           # width-interp matrix block
    zw_sz = C * Hi * W * mm_itemsize            # hoisted width-interp scratch
    hoist = zw_sz <= scoped // 3
    fixed = x_blk + bt_blk + (zw_sz if hoist else 0) + (2 << 20)

    # Per output row: label rows (dbuf, i32) + A rows (dbuf) + ~10 f32 (.,W) slabs
    # for the streamed online-softmax state / temporaries.
    per_row = 2 * W * 4 + 2 * Hi * mm_itemsize + 10 * W * 4
    avail = max(scoped - fixed, sub * per_row)
    max_rows = max(sub, (avail // per_row) // sub * sub)

    n_t = max(1, _ceil_div(H, max_rows))
    Ht = _ceil_div(_ceil_div(H, n_t), sub) * sub
    n_t = _ceil_div(H, Ht)
    Hp = n_t * Ht
    return Ht, Hp, n_t, hoist, scoped


def _seg_ce_kernel(w_ref, x_ref, lab_ref, a_ref, bt_ref, loss_ref, cnt_ref, zw_ref,
                   *, ignore_index, hoist_width, channel_unroll):
    t = pl.program_id(1)
    C = x_ref.shape[1]
    Hi = x_ref.shape[2]
    Wi = x_ref.shape[3]

    @pl.when(t == 0)
    def _init():
        loss_ref[...] = jnp.zeros_like(loss_ref)
        cnt_ref[...] = jnp.zeros_like(cnt_ref)
        if hoist_width:
            # Width interpolation once per batch element: lane-dense matmul
            # (C*Hi, Wi) @ (Wi, W) -> persistent VMEM scratch (C, Hi, W).
            xb = x_ref[0].reshape(C * Hi, Wi).astype(bt_ref.dtype)
            zw = jnp.dot(xb, bt_ref[...], preferred_element_type=jnp.float32)
            zw_ref[...] = zw.reshape(C, Hi, zw.shape[-1]).astype(zw_ref.dtype)

    A = a_ref[...]                     # (Ht, Hi) rows of the height-interp matrix
    lab = lab_ref[0]                   # (Ht, W) int32 class ids
    Ht, W = lab.shape
    valid = lab != ignore_index
    lab_safe = jnp.where(valid, lab, 0)

    def channel_logits(c):
        if hoist_width:
            zin = zw_ref[c]            # (Hi, W)
            return jnp.dot(A, zin.astype(A.dtype),
                           preferred_element_type=jnp.float32)
        # Fallback (zw hoist did not fit VMEM): width interp per channel per tile.
        # TODO(synk): this path fully unrolls over C; use chunked recompute for
        # very large C on tight-VMEM parts.
        xc = x_ref[0, c].astype(bt_ref.dtype)            # (Hi, Wi)
        zw_c = jnp.dot(xc, bt_ref[...], preferred_element_type=jnp.float32)
        return jnp.dot(A, zw_c.astype(A.dtype), preferred_element_type=jnp.float32)

    def body(c, carry):
        m, sumexp, z_y, w_y = carry
        zc = channel_logits(c)                           # (Ht, W) f32
        m_new = jnp.maximum(m, zc)
        alpha = jnp.exp(m - m_new)
        sumexp = alpha * sumexp + jnp.exp(zc - m_new)
        sel = lab_safe == c
        z_y = jnp.where(sel, zc, z_y)
        w_y = jnp.where(sel, w_ref[c], w_y)              # scalar SMEM read
        return m_new, sumexp, z_y, w_y

    carry = (jnp.full((Ht, W), -jnp.inf, jnp.float32),   # running max
             jnp.zeros((Ht, W), jnp.float32),            # running sum-exp
             jnp.zeros((Ht, W), jnp.float32),            # target-class logit
             jnp.zeros((Ht, W), jnp.float32))            # target-class weight

    if (not hoist_width) or C <= 16:
        for c in range(C):                               # static unroll (small C)
            carry = body(c, carry)
    else:
        carry = jax.lax.fori_loop(0, C, body, carry, unroll=channel_unroll)

    m, sumexp, z_y, w_y = carry
    lse = m + jnp.log(sumexp)
    validf = valid.astype(jnp.float32)
    pix = w_y * (lse - z_y) * validf                     # weighted CE, 0 at ignored

    loss_ref[...] += jnp.sum(pix)
    cnt_ref[...] += jnp.sum(validf)


def seg_cross_entropy_loss(out, label, *, ignore_index=255, class_weight=None,
                           balanced=False, reduction='mean', h_tile=None):
    """Forward pass of SegCrossEntropyLoss (reduction='mean' or 'sum')."""
    if label.ndim == 4:
        label = jnp.squeeze(label, axis=1)
    label = label.astype(jnp.int32)
    out = jnp.asarray(out)

    B, C, Hi, Wi = out.shape
    Bl, H, W = label.shape
    assert B == Bl
    ignore_index = -100 if ignore_index is None else int(ignore_index)

    if balanced:
        assert class_weight is None
        # The torch assert `max(masked_label) < 2` has no traced equivalent; the
        # balanced path statically assumes a binary problem.
        assert C == 2, "balanced=True assumes a binary (2-class) problem"
        maskf = (label != ignore_index).astype(jnp.float32)
        labf = jnp.clip(label.astype(jnp.float32), 0.0, 1.0)
        num_neg = jnp.sum((1.0 - labf) * maskf)
        num_total = jnp.maximum(jnp.sum(maskf), 1.0)
        w_pos = num_neg / num_total
        class_weight = jnp.stack([1.0 - w_pos, w_pos])

    if class_weight is None:
        w = jnp.ones((C,), jnp.float32)
    else:
        w = jnp.asarray(class_weight, jnp.float32).reshape(C)

    # bf16 logits feed the MXU in bf16 (f32 accumulation); f32 logits stay f32.
    mm_dtype = jnp.bfloat16 if out.dtype == jnp.bfloat16 else jnp.float32
    mm_itemsize = jnp.dtype(mm_dtype).itemsize
    x_itemsize = jnp.dtype(out.dtype).itemsize

    Ht, Hp, n_t, hoist, vmem_limit = _plan_tiling(H, W, C, Hi, Wi,
                                                  x_itemsize, mm_itemsize)
    if h_tile is not None:
        Ht = int(h_tile)
        n_t = _ceil_div(H, Ht)
        Hp = n_t * Ht

    # Height-interp matrix, zero-padded to the tile multiple (padded rows produce
    # zero logits but are masked out because the padded labels are ignore_index).
    A_np = np.zeros((Hp, Hi), dtype=np.float32)
    A_np[:H] = _interp_matrix(H, Hi)
    A = jnp.asarray(A_np, mm_dtype)
    Bt = jnp.asarray(_interp_matrix(W, Wi).T, mm_dtype)       # (Wi, W)

    if Hp != H:
        label = jnp.pad(label, ((0, 0), (0, Hp - H), (0, 0)),
                        constant_values=ignore_index)

    zw_shape = (C, Hi, W) if hoist else (1, 8, 128)
    zw_dtype = mm_dtype if hoist else jnp.float32

    kernel = functools.partial(_seg_ce_kernel, ignore_index=ignore_index,
                               hoist_width=hoist, channel_unroll=4)

    loss_part, cnt_part = pl.pallas_call(
        kernel,
        out_shape=(jax.ShapeDtypeStruct((B, 1, 1), jnp.float32),
                   jax.ShapeDtypeStruct((B, 1, 1), jnp.float32)),
        grid_spec=pltpu.PrefetchScalarGridSpec(
            num_scalar_prefetch=1,                 # class weights -> SMEM
            grid=(B, n_t),
            in_specs=[
                pl.BlockSpec((1, C, Hi, Wi), lambda b, t, w: (b, 0, 0, 0)),  # logits
                pl.BlockSpec((1, Ht, W),     lambda b, t, w: (b, t, 0)),      # label tile
                pl.BlockSpec((Ht, Hi),       lambda b, t, w: (t, 0)),         # A rows
                pl.BlockSpec((Wi, W),        lambda b, t, w: (0, 0)),         # Bt (full)
            ],
            out_specs=[
                pl.BlockSpec((1, 1, 1), lambda b, t, w: (b, 0, 0)),           # loss partial
                pl.BlockSpec((1, 1, 1), lambda b, t, w: (b, 0, 0)),           # valid count
            ],
            scratch_shapes=[pltpu.VMEM(zw_shape, zw_dtype)],                  # hoisted zw
        ),
        compiler_params=pltpu.CompilerParams(
            dimension_semantics=("parallel", "arbitrary"),
            vmem_limit_bytes=int(vmem_limit)),
    )(w, out, label, A, Bt)

    loss_sum = jnp.sum(loss_part)
    n_valid = jnp.sum(cnt_part)
    if reduction == 'mean':
        # Matches the PyTorch module: divides by the valid-pixel COUNT (the module
        # uses reduction='none' then loss.sum() / max(n_valid, 1)).
        return loss_sum / jnp.maximum(n_valid, 1.0)
    elif reduction == 'sum':
        return loss_sum
    else:
        # TODO(synk): reduction='none' (per-pixel (B,H,W) loss map) needs a second
        # kernel variant writing a full-resolution output; not implemented here.
        raise NotImplementedError("reduction='none' not supported in the Pallas port")


def _seg_ce_ref(out, label, ignore_index, class_weight=None, reduction='mean'):
    """Pure-JAX reference replicating the PyTorch forward."""
    lab = jnp.squeeze(label, axis=1) if label.ndim == 4 else label
    lab = lab.astype(jnp.int32)
    B, C, Hi, Wi = out.shape
    H, W = lab.shape[1], lab.shape[2]
    A = jnp.asarray(_interp_matrix(H, Hi))
    Bt = jnp.asarray(_interp_matrix(W, Wi).T)
    z = jnp.einsum('hp,bcpq,qw->bchw', A, out.astype(jnp.float32), Bt)
    valid = lab != ignore_index
    lab_safe = jnp.where(valid, lab, 0)
    lse = jax.nn.logsumexp(z, axis=1)
    z_y = jnp.take_along_axis(z, lab_safe[:, None, :, :], axis=1)[:, 0]
    w = jnp.ones((C,), jnp.float32) if class_weight is None else jnp.asarray(class_weight, jnp.float32)
    w_y = w[lab_safe]
    pix = jnp.where(valid, w_y * (lse - z_y), 0.0)
    if reduction == 'mean':
        return jnp.sum(pix) / jnp.maximum(jnp.sum(valid).astype(jnp.float32), 1.0)
    elif reduction == 'sum':
        return jnp.sum(pix)
    return pix


if __name__ == "__main__":
    key = jax.random.PRNGKey(0)
    k1, k2, k3 = jax.random.split(key, 3)

    B, C, Hi, Wi = 2, 4, 8, 8          # low-resolution logits
    H, W = 16, 16                      # label resolution
    IGNORE = 255

    logits = jax.random.normal(k1, (B, C, Hi, Wi), dtype=jnp.float32)
    label = jax.random.randint(k2, (B, 1, H, W), 0, C, dtype=jnp.int32)
    label = label.at[0, 0, 0:3, 0:5].set(IGNORE)     # ignored region
    label = label.at[1, 0, 10:12, :].set(IGNORE)     # ignored rows

    # 1) Unweighted, reduction='mean'
    loss = jax.block_until_ready(
        seg_cross_entropy_loss(logits, label, ignore_index=IGNORE, reduction='mean'))
    ref = _seg_ce_ref(logits, label, IGNORE, None, 'mean')
    assert np.allclose(np.asarray(loss), np.asarray(ref), rtol=1e-4, atol=1e-5), (loss, ref)

    # 2) Class-weighted, reduction='sum', forced multi-tile (exercises accumulation)
    cw = jnp.array([1.0, 2.0, 0.5, 1.5], jnp.float32)
    loss_w = jax.block_until_ready(
        seg_cross_entropy_loss(logits, label, ignore_index=IGNORE,
                               class_weight=cw, reduction='sum', h_tile=8))
    ref_w = _seg_ce_ref(logits, label, IGNORE, cw, 'sum')
    assert np.allclose(np.asarray(loss_w), np.asarray(ref_w), rtol=1e-4, atol=1e-5), (loss_w, ref_w)

    # 3) Ragged H (padding path) with multiple tiles
    H2, W2 = 20, 24
    label2 = jax.random.randint(k3, (B, 1, H2, W2), 0, C, dtype=jnp.int32)
    label2 = label2.at[0, 0, :2, :].set(IGNORE)
    loss2 = jax.block_until_ready(
        seg_cross_entropy_loss(logits, label2, ignore_index=IGNORE,
                               reduction='mean', h_tile=8))
    ref2 = _seg_ce_ref(logits, label2, IGNORE, None, 'mean')
    assert np.allclose(np.asarray(loss2), np.asarray(ref2), rtol=1e-4, atol=1e-5), (loss2, ref2)

    # 4) bf16 logits -> bf16 MXU operands with f32 accumulation (looser tolerance)
    logits_bf16 = logits.astype(jnp.bfloat16)
    loss_bf = jax.block_until_ready(
        seg_cross_entropy_loss(logits_bf16, label, ignore_index=IGNORE, reduction='mean'))
    ref_bf = _seg_ce_ref(logits_bf16, label, IGNORE, None, 'mean')
    assert np.allclose(np.asarray(loss_bf), np.asarray(ref_bf), rtol=5e-2, atol=5e-2), (loss_bf, ref_bf)

    print("KERNEL_OK")
</pallas_src>

<mosaic_0001>
module attributes {stable_mosaic.version = 11 : i64} {
  func.func @_seg_ce_kernel(%arg0: i32, %arg1: i32, %arg2: memref<4xf32, #tpu.memory_space<smem>>, %arg3: memref<1x4x8x8xf32, #tpu.memory_space<vmem>>, %arg4: memref<1x16x16xi32, #tpu.memory_space<vmem>>, %arg5: memref<16x8xf32, #tpu.memory_space<vmem>>, %arg6: memref<8x16xf32, #tpu.memory_space<vmem>>, %arg7: memref<1x1x1xf32, #tpu.memory_space<vmem>>, %arg8: memref<1x1x1xf32, #tpu.memory_space<vmem>>, %arg9: memref<4x8x16xf32, #tpu.memory_space<vmem>>) attributes {dimension_semantics = [#tpu.dimension_semantics<parallel>, #tpu.dimension_semantics<arbitrary>], iteration_bounds = array<i64: 2, 1>, scalar_prefetch = 1 : i64, scratch_operands = 1 : i64, tpu.core_type = #tpu.core_type<tc>, window_params = [{transform_indices = @transform_0, window_bounds = array<i64: 1, 4, 8, 8>}, {transform_indices = @transform_1, window_bounds = array<i64: 1, 16, 16>}, {transform_indices = @transform_2, window_bounds = array<i64: 16, 8>}, {pipeline_mode = #tpu.pipeline_mode<synchronous>, transform_indices = @transform_3, window_bounds = array<i64: 8, 16>}, {transform_indices = @transform_4, window_bounds = array<i64: 1, 1, 1>}, {transform_indices = @transform_5, window_bounds = array<i64: 1, 1, 1>}]} {
    %c0_i32 = arith.constant 0 : i32
    %0 = arith.cmpi eq, %arg1, %c0_i32 : i32
    %1 = arith.extui %0 : i1 to i32
    %c0_i32_0 = arith.constant 0 : i32
    %2 = arith.cmpi ne, %1, %c0_i32_0 : i32
    scf.if %2 {
      %cst_41 = arith.constant 0.000000e+00 : f32
      %101 = vector.broadcast %cst_41 : f32 to vector<1x1x1xf32>
      %c0_42 = arith.constant 0 : index
      %c0_43 = arith.constant 0 : index
      %c0_44 = arith.constant 0 : index
      %102 = vector.load %arg7[%c0_42, %c0_43, %c0_44] : memref<1x1x1xf32, #tpu.memory_space<vmem>>, vector<1x1x1xf32>
      tpu.vector_store %arg7[%c0_42, %c0_43, %c0_44], %101 {strides = array<i32>} : memref<1x1x1xf32, #tpu.memory_space<vmem>>, vector<1x1x1xf32>,
      %cst_45 = arith.constant 0.000000e+00 : f32
      %103 = vector.broadcast %cst_45 : f32 to vector<1x1x1xf32>
      %c0_46 = arith.constant 0 : index
      %c0_47 = arith.constant 0 : index
      %c0_48 = arith.constant 0 : index
      %104 = vector.load %arg8[%c0_46, %c0_47, %c0_48] : memref<1x1x1xf32, #tpu.memory_space<vmem>>, vector<1x1x1xf32>
      tpu.vector_store %arg8[%c0_46, %c0_47, %c0_48], %103 {strides = array<i32>} : memref<1x1x1xf32, #tpu.memory_space<vmem>>, vector<1x1x1xf32>,
      %c0_49 = arith.constant 0 : index
      %c0_50 = arith.constant 0 : index
      %c0_51 = arith.constant 0 : index
      %c0_52 = arith.constant 0 : index
      %105 = vector.load %arg3[%c0_49, %c0_50, %c0_51, %c0_52] : memref<1x4x8x8xf32, #tpu.memory_space<vmem>>, vector<1x4x8x8xf32>
      %106 = vector.shape_cast %105 : vector<1x4x8x8xf32> to vector<4x8x8xf32>
      %107 = vector.shape_cast %106 : vector<4x8x8xf32> to vector<32x8xf32>
      %c0_53 = arith.constant 0 : index
      %c0_54 = arith.constant 0 : index
      %108 = vector.load %arg6[%c0_53, %c0_54] : memref<8x16xf32, #tpu.memory_space<vmem>>, vector<8x16xf32>
      %cst_55 = arith.constant dense<0.000000e+00> : vector<32x16xf32>
      %109 = tpu.matmul %107, %108, %cst_55 {dimension_numbers = #tpu.dot_dimension_numbers<[1], [0], [0], [1], [0, 0, 1, 1], [], []>} : vector<32x8xf32>, vector<8x16xf32>, vector<32x16xf32> -> vector<32x16xf32>
      %110 = vector.shape_cast %109 : vector<32x16xf32> to vector<4x8x16xf32>
      %c0_56 = arith.constant 0 : index
      %c0_57 = arith.constant 0 : index
      %c0_58 = arith.constant 0 : index
      %111 = vector.load %arg9[%c0_56, %c0_57, %c0_58] : memref<4x8x16xf32, #tpu.memory_space<vmem>>, vector<4x8x16xf32>
      tpu.vector_store %arg9[%c0_56, %c0_57, %c0_58], %110 {strides = array<i32>} : memref<4x8x16xf32, #tpu.memory_space<vmem>>, vector<4x8x16xf32>,
    } else {
    }
    %c0 = arith.constant 0 : index
    %c0_1 = arith.constant 0 : index
    %3 = vector.load %arg5[%c0, %c0_1] : memref<16x8xf32, #tpu.memory_space<vmem>>, vector<16x8xf32>
    %c0_2 = arith.constant 0 : index
    %c0_3 = arith.constant 0 : index
    %c0_4 = arith.constant 0 : index
    %4 = vector.load %arg4[%c0_2, %c0_3, %c0_4] : memref<1x16x16xi32, #tpu.memory_space<vmem>>, vector<1x16x16xi32>
    %5 = vector.shape_cast %4 : vector<1x16x16xi32> to vector<16x16xi32>
    %c255_i32 = arith.constant 255 : i32
    %6 = vector.broadcast %c255_i32 : i32 to vector<16x16xi32>
    %7 = arith.cmpi ne, %5, %6 : vector<16x16xi32>
    %c0_i32_5 = arith.constant 0 : i32
    %8 = vector.broadcast %c0_i32_5 : i32 to vector<16x16xi32>
    %9 = arith.select %7, %5, %8 : vector<16x16xi1>, vector<16x16xi32>
    %cst = arith.constant 0xFF800000 : f32
    %10 = vector.broadcast %cst : f32 to vector<16x16xf32>
    %cst_6 = arith.constant 0.000000e+00 : f32
    %11 = vector.broadcast %cst_6 : f32 to vector<16x16xf32>
    %cst_7 = arith.constant 0.000000e+00 : f32
    %12 = vector.broadcast %cst_7 : f32 to vector<16x16xf32>
    %cst_8 = arith.constant 0.000000e+00 : f32
    %13 = vector.broadcast %cst_8 : f32 to vector<16x16xf32>
    %c0_9 = arith.constant 0 : index
    %c0_10 = arith.constant 0 : index
    %c0_11 = arith.constant 0 : index
    %14 = vector.load %arg9[%c0_9, %c0_10, %c0_11] : memref<4x8x16xf32, #tpu.memory_space<vmem>>, vector<1x8x16xf32>
    %15 = vector.shape_cast %14 : vector<1x8x16xf32> to vector<8x16xf32>
    %cst_12 = arith.constant dense<0.000000e+00> : vector<16x16xf32>
    %16 = tpu.matmul %3, %15, %cst_12 {dimension_numbers = #tpu.dot_dimension_numbers<[1], [0], [0], [1], [0, 0, 1, 1], [], []>} : vector<16x8xf32>, vector<8x16xf32>, vector<16x16xf32> -> vector<16x16xf32>
    %17 = arith.maximumf %10, %16 : vector<16x16xf32>
    %18 = arith.subf %10, %17 : vector<16x16xf32>
    %19 = math.exp %18 : vector<16x16xf32>
    %20 = arith.mulf %19, %11 : vector<16x16xf32>
    %21 = arith.subf %16, %17 : vector<16x16xf32>
    %22 = math.exp %21 : vector<16x16xf32>
    %23 = arith.addf %20, %22 : vector<16x16xf32>
    %c0_i32_13 = arith.constant 0 : i32
    %24 = vector.broadcast %c0_i32_13 : i32 to vector<16x16xi32>
    %25 = arith.cmpi eq, %9, %24 : vector<16x16xi32>
    %26 = arith.select %25, %16, %12 : vector<16x16xi1>, vector<16x16xf32>
    %c0_14 = arith.constant 0 : index
    %27 = memref.load %arg2[%c0_14] : memref<4xf32, #tpu.memory_space<smem>>
    %28 = vector.broadcast %27 : f32 to vector<16x16xf32>
    %29 = arith.select %25, %28, %13 : vector<16x16xi1>, vector<16x16xf32>
    %c1 = arith.constant 1 : index
    %c0_15 = arith.constant 0 : index
    %c0_16 = arith.constant 0 : index
    %30 = vector.load %arg9[%c1, %c0_15, %c0_16] : memref<4x8x16xf32, #tpu.memory_space<vmem>>, vector<1x8x16xf32>
    %31 = vector.shape_cast %30 : vector<1x8x16xf32> to vector<8x16xf32>
    %cst_17 = arith.constant dense<0.000000e+00> : vector<16x16xf32>
    %32 = tpu.matmul %3, %31, %cst_17 {dimension_numbers = #tpu.dot_dimension_numbers<[1], [0], [0], [1], [0, 0, 1, 1], [], []>} : vector<16x8xf32>, vector<8x16xf32>, vector<16x16xf32> -> vector<16x16xf32>
    %33 = arith.maximumf %17, %32 : vector<16x16xf32>
    %34 = arith.subf %17, %33 : vector<16x16xf32>
    %35 = math.exp %34 : vector<16x16xf32>
    %36 = arith.mulf %35, %23 : vector<16x16xf32>
    %37 = arith.subf %32, %33 : vector<16x16xf32>
    %38 = math.exp %37 : vector<16x16xf32>
    %39 = arith.addf %36, %38 : vector<16x16xf32>
    %c1_i32 = arith.constant 1 : i32
    %40 = vector.broadcast %c1_i32 : i32 to vector<16x16xi32>
    %41 = arith.cmpi eq, %9, %40 : vector<16x16xi32>
    %42 = arith.select %41, %32, %26 : vector<16x16xi1>, vector<16x16xf32>
    %c1_18 = arith.constant 1 : index
    %43 = memref.load %arg2[%c1_18] : memref<4xf32, #tpu.memory_space<smem>>
    %44 = vector.broadcast %43 : f32 to vector<16x16xf32>
    %45 = arith.select %41, %44, %29 : vector<16x16xi1>, vector<16x16xf32>
    %c2 = arith.constant 2 : index
    %c0_19 = arith.constant 0 : index
    %c0_20 = arith.constant 0 : index
    %46 = vector.load %arg9[%c2, %c0_19, %c0_20] : memref<4x8x16xf32, #tpu.memory_space<vmem>>, vector<1x8x16xf32>
    %47 = vector.shape_cast %46 : vector<1x8x16xf32> to vector<8x16xf32>
    %cst_21 = arith.constant dense<0.000000e+00> : vector<16x16xf32>
    %48 = tpu.matmul %3, %47, %cst_21 {dimension_numbers = #tpu.dot_dimension_numbers<[1], [0], [0], [1], [0, 0, 1, 1], [], []>} : vector<16x8xf32>, vector<8x16xf32>, vector<16x16xf32> -> vector<16x16xf32>
    %49 = arith.maximumf %33, %48 : vector<16x16xf32>
    %50 = arith.subf %33, %49 : vector<16x16xf32>
    %51 = math.exp %50 : vector<16x16xf32>
    %52 = arith.mulf %51, %39 : vector<16x16xf32>
    %53 = arith.subf %48, %49 : vector<16x16xf32>
    %54 = math.exp %53 : vector<16x16xf32>
    %55 = arith.addf %52, %54 : vector<16x16xf32>
    %c2_i32 = arith.constant 2 : i32
    %56 = vector.broadcast %c2_i32 : i32 to vector<16x16xi32>
    %57 = arith.cmpi eq, %9, %56 : vector<16x16xi32>
    %58 = arith.select %57, %48, %42 : vector<16x16xi1>, vector<16x16xf32>
    %c2_22 = arith.constant 2 : index
    %59 = memref.load %arg2[%c2_22] : memref<4xf32, #tpu.memory_space<smem>>
    %60 = vector.broadcast %59 : f32 to vector<16x16xf32>
    %61 = arith.select %57, %60, %45 : vector<16x16xi1>, vector<16x16xf32>
    %c3 = arith.constant 3 : index
    %c0_23 = arith.constant 0 : index
    %c0_24 = arith.constant 0 : index
    %62 = vector.load %arg9[%c3, %c0_23, %c0_24] : memref<4x8x16xf32, #tpu.memory_space<vmem>>, vector<1x8x16xf32>
    %63 = vector.shape_cast %62 : vector<1x8x16xf32> to vector<8x16xf32>
    %cst_25 = arith.constant dense<0.000000e+00> : vector<16x16xf32>
    %64 = tpu.matmul %3, %63, %cst_25 {dimension_numbers = #tpu.dot_dimension_numbers<[1], [0], [0], [1], [0, 0, 1, 1], [], []>} : vector<16x8xf32>, vector<8x16xf32>, vector<16x16xf32> -> vector<16x16xf32>
    %65 = arith.maximumf %49, %64 : vector<16x16xf32>
    %66 = arith.subf %49, %65 : vector<16x16xf32>
    %67 = math.exp %66 : vector<16x16xf32>
    %68 = arith.mulf %67, %55 : vector<16x16xf32>
    %69 = arith.subf %64, %65 : vector<16x16xf32>
    %70 = math.exp %69 : vector<16x16xf32>
    %71 = arith.addf %68, %70 : vector<16x16xf32>
    %c3_i32 = arith.constant 3 : i32
    %72 = vector.broadcast %c3_i32 : i32 to vector<16x16xi32>
    %73 = arith.cmpi eq, %9, %72 : vector<16x16xi32>
    %74 = arith.select %73, %64, %58 : vector<16x16xi1>, vector<16x16xf32>
    %c3_26 = arith.constant 3 : index
    %75 = memref.load %arg2[%c3_26] : memref<4xf32, #tpu.memory_space<smem>>
    %76 = vector.broadcast %75 : f32 to vector<16x16xf32>
    %77 = arith.select %73, %76, %61 : vector<16x16xi1>, vector<16x16xf32>
    %78 = math.log %71 : vector<16x16xf32>
    %79 = arith.addf %65, %78 : vector<16x16xf32>
    %80 = arith.extui %7 : vector<16x16xi1> to vector<16x16xi32>
    %81 = arith.sitofp %80 : vector<16x16xi32> to vector<16x16xf32>
    %82 = arith.subf %79, %74 : vector<16x16xf32>
    %83 = arith.mulf %77, %82 : vector<16x16xf32>
    %84 = arith.mulf %83, %81 : vector<16x16xf32>
    %c0_27 = arith.constant 0 : index
    %c0_28 = arith.constant 0 : index
    %c0_29 = arith.constant 0 : index
    %85 = vector.load %arg7[%c0_27, %c0_28, %c0_29] : memref<1x1x1xf32, #tpu.memory_space<vmem>>, vector<1x1x1xf32>
    %86 = vector.shape_cast %84 : vector<16x16xf32> to vector<1x16x16xf32>
    %cst_30 = arith.constant dense<0.000000e+00> : vector<1xf32>
    %87 = vector.multi_reduction <add>, %86, %cst_30 [1, 2] : vector<1x16x16xf32> to vector<1xf32>
    %88 = vector.shape_cast %87 : vector<1xf32> to vector<1x1x1xf32>
    %89 = vector.extract %88[0, 0, 0] : f32 from vector<1x1x1xf32>
    %90 = vector.broadcast %89 : f32 to vector<1x1x1xf32>
    %91 = arith.addf %85, %90 : vector<1x1x1xf32>
    %c0_31 = arith.constant 0 : index
    %c0_32 = arith.constant 0 : index
    %c0_33 = arith.constant 0 : index
    %92 = vector.load %arg7[%c0_31, %c0_32, %c0_33] : memref<1x1x1xf32, #tpu.memory_space<vmem>>, vector<1x1x1xf32>
    tpu.vector_store %arg7[%c0_31, %c0_32, %c0_33], %91 {strides = array<i32>} : memref<1x1x1xf32, #tpu.memory_space<vmem>>, vector<1x1x1xf32>,
    %c0_34 = arith.constant 0 : index
    %c0_35 = arith.constant 0 : index
    %c0_36 = arith.constant 0 : index
    %93 = vector.load %arg8[%c0_34, %c0_35, %c0_36] : memref<1x1x1xf32, #tpu.memory_space<vmem>>, vector<1x1x1xf32>
    %94 = vector.shape_cast %81 : vector<16x16xf32> to vector<1x16x16xf32>
    %cst_37 = arith.constant dense<0.000000e+00> : vector<1xf32>
    %95 = vector.multi_reduction <add>, %94, %cst_37 [1, 2] : vector<1x16x16xf32> to vector<1xf32>
    %96 = vector.shape_cast %95 : vector<1xf32> to vector<1x1x1xf32>
    %97 = vector.extract %96[0, 0, 0] : f32 from vector<1x1x1xf32>
    %98 = vector.broadcast %97 : f32 to vector<1x1x1xf32>
    %99 = arith.addf %93, %98 : vector<1x1x1xf32>
    %c0_38 = arith.constant 0 : index
    %c0_39 = arith.constant 0 : index
    %c0_40 = arith.constant 0 : index
    %100 = vector.load %arg8[%c0_38, %c0_39, %c0_40] : memref<1x1x1xf32, #tpu.memory_space<vmem>>, vector<1x1x1xf32>
    tpu.vector_store %arg8[%c0_38, %c0_39, %c0_40], %99 {strides = array<i32>} : memref<1x1x1xf32, #tpu.memory_space<vmem>>, vector<1x1x1xf32>,
    return
  }
  func.func @transform_0(%arg0: i32, %arg1: i32, %arg2: memref<4xf32, #tpu.memory_space<smem>>) -> (i32, i32, i32, i32) {
    %c0_i32 = arith.constant 0 : i32
    %c0_i32_0 = arith.constant 0 : i32
    %c0_i32_1 = arith.constant 0 : i32
    %c0_i32_2 = arith.constant 0 : i32
    return %arg0, %c0_i32, %c0_i32_0, %c0_i32_1 : i32, i32, i32, i32
  }
  func.func @transform_1(%arg0: i32, %arg1: i32, %arg2: memref<4xf32, #tpu.memory_space<smem>>) -> (i32, i32, i32) {
    %c0_i32 = arith.constant 0 : i32
    %c0_i32_0 = arith.constant 0 : i32
    return %arg0, %arg1, %c0_i32 : i32, i32, i32
  }
  func.func @transform_2(%arg0: i32, %arg1: i32, %arg2: memref<4xf32, #tpu.memory_space<smem>>) -> (i32, i32) {
    %c0_i32 = arith.constant 0 : i32
    %c0_i32_0 = arith.constant 0 : i32
    return %arg1, %c0_i32 : i32, i32
  }
  func.func @transform_3(%arg0: i32, %arg1: i32, %arg2: memref<4xf32, #tpu.memory_space<smem>>) -> (i32, i32) {
    %c0_i32 = arith.constant 0 : i32
    %c0_i32_0 = arith.constant 0 : i32
    %c0_i32_1 = arith.constant 0 : i32
    return %c0_i32, %c0_i32_0 : i32, i32
  }
  func.func @transform_4(%arg0: i32, %arg1: i32, %arg2: memref<4xf32, #tpu.memory_space<smem>>) -> (i32, i32, i32) {
    %c0_i32 = arith.constant 0 : i32
    %c0_i32_0 = arith.constant 0 : i32
    %c0_i32_1 = arith.constant 0 : i32
    return %arg0, %c0_i32, %c0_i32_0 : i32, i32, i32
  }
  func.func @transform_5(%arg0: i32, %arg1: i32, %arg2: memref<4xf32, #tpu.memory_space<smem>>) -> (i32, i32, i32) {
    %c0_i32 = arith.constant 0 : i32
    %c0_i32_0 = arith.constant 0 : i32
    %c0_i32_1 = arith.constant 0 : i32
    return %arg0, %c0_i32, %c0_i32_0 : i32, i32, i32
  }
}

</mosaic_0001>

<llo_original>
// kernel: tpu_custom_call.1
$region0: #{tpu_custom_call.1}
  #allocation0 [shape = 'u32[]', space=smem, size = 0x4, offset = 0x4, fixed_abs, tag = 'smem constant byte address 0x4 - core index']
  #allocation1 [shape = 'u32[144,128]{1,0:T(1,128)}', space=vmem, size = 0x12000, scoped, tag = 'internal scratch']
  #allocation2 [shape = 'f32[4,8,16]{2,1,0:T(8,128)}', space=vmem, size = 0x4000, scoped, tag = 'scratch operand']
  #allocation3 [shape = 's32[1]{0}', space=sflag, size = 0x4, scoped, tag = 'scoped memory for tpu_custom_call.1']
  #allocation4 [shape = 'u8[512]{0}', space=smem, size = 0x200, scoped, tag = 'prefetched SMEM operand 0']
  %s0 = inlined_call_operand.vmem [shape: f32[4], index: 0, kind: input, shape index: {}]
  %s1 = inlined_call_operand.hbm [shape: f32[2,4,8,8], index: 1, kind: input, shape index: {}]
  %s2 = inlined_call_operand.hbm [shape: s32[2,16,16], index: 2, kind: input, shape index: {}]
  %s3 = inlined_call_operand.vmem [shape: f32[16,8], index: 3, kind: input, shape index: {}]
  %s4 = inlined_call_operand.vmem [shape: f32[8,16], index: 4, kind: input, shape index: {}]
  %s5 = inlined_call_operand.vmem [shape: f32[2,1,1], index: 5, kind: output, shape index: {0}]
  %s6 = inlined_call_operand.vmem [shape: f32[2,1,1], index: 6, kind: output, shape index: {1}]
  %7 = xla_tuple %s5, %s6
  %s8 = sld [smem:[#allocation0]]
  $region69: #{tpu_custom_call.1} parent=0
    _
  %s10 = ssub.s32 1, %s8
  %s11 = scalar_select 0, %s10, %s8
  %s12 = sshll.u32 %s0, 4
  %s13 = int_to_ptr.vmem [resolvable:$true] %s12
  %15 = dma.vmem_to_smem %s13, 16, [#allocation4], [#allocation3]
  %16 = dma.done [#allocation3], 16
  %17 = sfence
  $region1: #{tpu_custom_call.1} parent=0
    #allocation5 [shape = 'u8[32768]{0}', space=vmem, size = 0x8000, scoped, tag = 'input window, operand 1']
    #allocation6 [shape = 's32[2]{0}', space=sflag, size = 0x8, scoped, tag = 'scoped memory for tpu_custom_call.1']
    #allocation7 [shape = 'u8[16384]{0}', space=vmem, size = 0x4000, scoped, tag = 'input window, operand 2']
    #allocation8 [shape = 's32[2]{0}', space=sflag, size = 0x8, scoped, tag = 'scoped memory for tpu_custom_call.1']
    %18 = vsyncpa [#allocation6], 0
    %s19 = scalar_lea.sflag [#allocation6], 1
    %20 = vsyncpa %s19, 0
    %21 = vsyncpa [#allocation8], 0
    %s22 = scalar_lea.sflag [#allocation8], 1
    %23 = vsyncpa %s22, 0
    loop: start=0, step=1, limit=4
    $region2: #{tpu_custom_call.1} parent=1 // loop_pre_header
      _
    $region3: #{tpu_custom_call.1} parent=1 // loop_header
      %s25 = sphi 0, %s29
      %p26 = scmp.ge.s32.totalorder %s25, 4
      %s32 = sphi 0, %s44
      %s33 = sphi 0, %s40
      %s34 = sphi 0, %s32
      %s35 = sphi 0, %s33
      %s36 = sphi 0, %s34
      %s37 = sphi 0, %s35
      %s47 = sphi 0, %s49
      %s50 = sphi 0, %s47
      %s51 = sphi 0, %s50
      %s67 = sphi 0, %s51
      %s75 = sphi 0, %s77
      %s78 = sphi 0, %s75
      %s79 = sphi 0, %s78
      %s95 = sphi 0, %s79
      %s101 = sphi 0, %s103
      %s104 = sphi 0, %s101
      %s105 = sphi 0, %s104
      %s121 = sphi 0, %s105
      %s125 = sphi 0, %s125
      %s127 = sphi 0, %s125
      %s128 = sphi 0, %s127
      %s142 = sphi 0, %s128
      %s148 = sphi 0, %s150
      %s151 = sphi 0, %s148
      %s152 = sphi 0, %s151
      %s168 = sphi 0, %s152
      %s174 = sphi 0, %s176
      %s177 = sphi 0, %s174
      %s178 = sphi 0, %s177
      %s194 = sphi 0, %s178
    $region4: #{tpu_custom_call.1} parent=1 // loop_header_branch
      %28 = sbr.rel (%p26) target = $region8
    $region5: #{tpu_custom_call.1} parent=1 // loop_body
      %s30 = ssub.s32 %s25, 1
      %s31 = ssub.s32 %s25, 2
      %s38 = sadd.s32 1, %s33
      %p39 = scmp.ge.s32.totalorder %s38, 1
      %s40 = scalar_select %p39, 0, %s38
      %s41 = sadd.s32 1, %s32
      %s42 = scalar_select %p39, %s41, %s32
      %p43 = scmp.ge.s32.totalorder %s42, 2
      %s44 = scalar_select %p43, 0, %s42
      %s45 = ssub.s32 %s32, %s44
      %p46 = scmp.eq.s32.totalorder %s45, 0
      %s48 = sadd.s32 %s47, 1
      %s49 = scalar_select %p46, %s47, %s48
      %p52 = pneg %p46
      %p53 = scmp.eq.s32.totalorder %s25, 1
      %p54 = por %p52, %p53
      %p55 = scmp.ne.s32.totalorder %s47, %s50
      %p56 = scmp.eq.s32.totalorder %s25, 0
      %p57 = por %p55, %p56
      %p58 = scmp.ne.s32.totalorder %s47, %s50
      %p59 = scmp.eq.s32.totalorder %s30, 1
      %p60 = por %p58, %p59
      %p61 = scmp.ne.s32.totalorder %s50, %s51
      %p62 = scmp.eq.s32.totalorder %s30, 0
      %p63 = por %p61, %p62
      %p64 = scmp.ne.s32.totalorder %s50, %s51
      %p65 = scmp.eq.s32.totalorder %s31, 1
      %p66 = por %p64, %p65
      %p68 = scmp.ne.s32.totalorder %s51, %s67
      %p69 = scmp.eq.s32.totalorder %s31, 0
      %p70 = por %p68, %p69
      %s71 = ssub.s32 %s32, %s44
      %s72 = ssub.s32 %s33, %s40
      %s73 = sor.u32 %s71, %s72
      %p74 = scmp.eq.s32.totalorder %s73, 0
      %s76 = sadd.s32 %s75, 1
      %s77 = scalar_select %p74, %s75, %s76
      %p80 = pneg %p74
      %p81 = scmp.eq.s32.totalorder %s25, 1
      %p82 = por %p80, %p81
      %p83 = scmp.ne.s32.totalorder %s75, %s78
      %p84 = scmp.eq.s32.totalorder %s25, 0
      %p85 = por %p83, %p84
      %p86 = scmp.ne.s32.totalorder %s75, %s78
      %p87 = scmp.eq.s32.totalorder %s30, 1
      %p88 = por %p86, %p87
      %p89 = scmp.ne.s32.totalorder %s78, %s79
      %p90 = scmp.eq.s32.totalorder %s30, 0
      %p91 = por %p89, %p90
      %p92 = scmp.ne.s32.totalorder %s78, %s79
      %p93 = scmp.eq.s32.totalorder %s31, 1
      %p94 = por %p92, %p93
      %p96 = scmp.ne.s32.totalorder %s79, %s95
      %p97 = scmp.eq.s32.totalorder %s31, 0
      %p98 = por %p96, %p97
      %s99 = ssub.s32 %s33, %s40
      %p100 = scmp.eq.s32.totalorder %s99, 0
      %s102 = sadd.s32 %s101, 1
      %s103 = scalar_select %p100, %s101, %s102
      %p106 = pneg %p100
      %p107 = scmp.eq.s32.totalorder %s25, 1
      %p108 = por %p106, %p107
      %p109 = scmp.ne.s32.totalorder %s101, %s104
      %p110 = scmp.eq.s32.totalorder %s25, 0
      %p111 = por %p109, %p110
      %p112 = scmp.ne.s32.totalorder %s101, %s104
      %p113 = scmp.eq.s32.totalorder %s30, 1
      %p114 = por %p112, %p113
      %p115 = scmp.ne.s32.totalorder %s104, %s105
      %p116 = scmp.eq.s32.totalorder %s30, 0
      %p117 = por %p115, %p116
      %p118 = scmp.ne.s32.totalorder %s104, %s105
      %p119 = scmp.eq.s32.totalorder %s31, 1
      %p120 = por %p118, %p119
      %p122 = scmp.ne.s32.totalorder %s105, %s121
      %p123 = scmp.eq.s32.totalorder %s31, 0
      %p124 = por %p122, %p123
      %s126 = sadd.s32 %s125, 1
      %p129 = scmp.eq.s32.totalorder %s25, 1
      %p130 = scmp.ne.s32.totalorder %s125, %s127
      %p131 = scmp.eq.s32.totalorder %s25, 0
      %p132 = por %p130, %p131
      %p133 = scmp.ne.s32.totalorder %s125, %s127
      %p134 = scmp.eq.s32.totalorder %s30, 1
      %p135 = por %p133, %p134
      %p136 = scmp.ne.s32.totalorder %s127, %s128
      %p137 = scmp.eq.s32.totalorder %s30, 0
      %p138 = por %p136, %p137
      %p139 = scmp.ne.s32.totalorder %s127, %s128
      %p140 = scmp.eq.s32.totalorder %s31, 1
      %p141 = por %p139, %p140
      %p143 = scmp.ne.s32.totalorder %s128, %s142
      %p144 = scmp.eq.s32.totalorder %s31, 0
      %p145 = por %p143, %p144
      %s146 = ssub.s32 %s32, %s44
      %p147 = scmp.eq.s32.totalorder %s146, 0
      %s149 = sadd.s32 %s148, 1
      %s150 = scalar_select %p147, %s148, %s149
      %p153 = pneg %p147
      %p154 = scmp.eq.s32.totalorder %s25, 1
      %p155 = por %p153, %p154
      %p156 = scmp.ne.s32.totalorder %s148, %s151
      %p157 = scmp.eq.s32.totalorder %s25, 0
      %p158 = por %p156, %p157
      %p159 = scmp.ne.s32.totalorder %s148, %s151
      %p160 = scmp.eq.s32.totalorder %s30, 1
      %p161 = por %p159, %p160
      %p162 = scmp.ne.s32.totalorder %s151, %s152
      %p163 = scmp.eq.s32.totalorder %s30, 0
      %p164 = por %p162, %p163
      %p165 = scmp.ne.s32.totalorder %s151, %s152
      %p166 = scmp.eq.s32.totalorder %s31, 1
      %p167 = por %p165, %p166
      %p169 = scmp.ne.s32.totalorder %s152, %s168
      %p170 = scmp.eq.s32.totalorder %s31, 0
      %p171 = por %p169, %p170
      %s172 = ssub.s32 %s32, %s44
      %p173 = scmp.eq.s32.totalorder %s172, 0
      %s175 = sadd.s32 %s174, 1
      %s176 = scalar_select %p173, %s174, %s175
      %p179 = pneg %p173
      %p180 = scmp.eq.s32.totalorder %s25, 1
      %p181 = por %p179, %p180
      %p182 = scmp.ne.s32.totalorder %s174, %s177
      %p183 = scmp.eq.s32.totalorder %s25, 0
      %p184 = por %p182, %p183
      %p185 = scmp.ne.s32.totalorder %s174, %s177
      %p186 = scmp.eq.s32.totalorder %s30, 1
      %p187 = por %p185, %p186
      %p188 = scmp.ne.s32.totalorder %s177, %s178
      %p189 = scmp.eq.s32.totalorder %s30, 0
      %p190 = por %p188, %p189
      %p191 = scmp.ne.s32.totalorder %s177, %s178
      %p192 = scmp.eq.s32.totalorder %s31, 1
      %p193 = por %p191, %p192
      %p195 = scmp.ne.s32.totalorder %s178, %s194
      %p196 = scmp.eq.s32.totalorder %s31, 0
      %p197 = por %p195, %p196
      %p198 = scmp.le.s32.totalorder 1, %s25
      %p199 = scmp.lt.s32.totalorder %s25, 3
      %p200 = pnand %p198, %p199
      %p201 = pneg %p200
      // Predicated region
      $region9: #{tpu_custom_call.1} parent=5 // pred_check
        _
      $region10: #{tpu_custom_call.1} parent=5 // pred_check_branch
        %203 = sbr.rel (%p200) target = $region12
      $region11: #{tpu_custom_call.1} parent=5 // pred_region
        %s204 = ssub.s32 %s25, 1
        // Predicated region
        $region13: #{tpu_custom_call.1} parent=11 // pred_check
          %p205 = pneg %p117
        $region14: #{tpu_custom_call.1} parent=11 // pred_check_branch
          %207 = sbr.rel (%p205) target = $region16
        $region15: #{tpu_custom_call.1} parent=11 // pred_region
          %s208 = smul.u32 2, %s35
          %p209 = scmp.lt.s32.totalorder %s208, 1
          %s210 = scalar_select %p209, %s208, 1
          %s211 = smul.addr %s210, 8
          %s212 = scalar_lea.vmem %s3, %s211
          %s213 = smul.u32 2, %s35
        $region16: #{tpu_custom_call.1} parent=11 // pred_fallthru
          _
        // Predicated region
        $region17: #{tpu_custom_call.1} parent=11 // pred_check
          %p214 = pneg %p138
        $region18: #{tpu_custom_call.1} parent=11 // pred_check_branch
          %216 = sbr.rel (%p214) target = $region20
        $region19: #{tpu_custom_call.1} parent=11 // pred_region
          _
        $region20: #{tpu_custom_call.1} parent=11 // pred_fallthru
          _
      $region12: #{tpu_custom_call.1} parent=5 // pred_fallthru
        _
      %p217 = scmp.lt.s32.totalorder %s25, 2
      // Predicated region
      $region21: #{tpu_custom_call.1} parent=5 // pred_check
        %p218 = pneg %p217
      $region22: #{tpu_custom_call.1} parent=5 // pred_check_branch
        %220 = sbr.rel (%p218) target = $region24
      $region23: #{tpu_custom_call.1} parent=5 // pred_region
        // Predicated region
        $region25: #{tpu_custom_call.1} parent=23 // pred_check
          %p221 = pneg %p57
        $region26: #{tpu_custom_call.1} parent=23 // pred_check_branch
          %223 = sbr.rel (%p221) target = $region28
        $region27: #{tpu_custom_call.1} parent=23 // pred_region
          %s224 = sand.u32 %s47, 1
          %s225 = scalar_lea.sflag [#allocation6], %s224
          %s226 = sand.u32 %s47, 1
          %s227 = smul.addr %s226, 32
          %s228 = scalar_lea.vmem [#allocation5], %s227
          %s230 = ssub.s32 512, 512
          %231 = vsyncadd %s225, %s230
          %s232 = smul.addr %s32, 4
          %s233 = smul.addr %s232, 128
          %s234 = scalar_lea.hbm %s1, %s233
          %s235 = sshll.u32 %s228, 4
          %s236 = int_to_ptr.vmem [resolvable:$true] %s235
          %241 = dma.hbm_to_vmem [thread:$0]  %s234, 512, %s236, %s225, 128, 128, 8
        $region28: #{tpu_custom_call.1} parent=23 // pred_fallthru
          _
        // Predicated region
        $region29: #{tpu_custom_call.1} parent=23 // pred_check
          %p242 = pneg %p85
        $region30: #{tpu_custom_call.1} parent=23 // pred_check_branch
          %244 = sbr.rel (%p242) target = $region32
        $region31: #{tpu_custom_call.1} parent=23 // pred_region
          %s245 = sand.u32 %s75, 1
          %s246 = scalar_lea.sflag [#allocation8], %s245
          %s247 = sand.u32 %s75, 1
          %s248 = smul.addr %s247, 16
          %s249 = scalar_lea.vmem [#allocation7], %s248
          %s250 = smul.u32 2, %s33
          %s252 = ssub.s32 256, 256
          %253 = vsyncadd %s246, %s252
          %s254 = smul.addr %s32, 2
          %s255 = sadd.s32 %s250, %s254
          %s256 = smul.addr %s255, 128
          %s257 = scalar_lea.hbm %s2, %s256
          %s258 = sshll.u32 %s249, 4
          %s259 = int_to_ptr.vmem [resolvable:$true] %s258
          %264 = dma.hbm_to_vmem [thread:$0]  %s257, 256, %s259, %s246, 128, 128, 8
        $region32: #{tpu_custom_call.1} parent=23 // pred_fallthru
          _
      $region24: #{tpu_custom_call.1} parent=5 // pred_fallthru
        _
      %p265 = scmp.le.s32.totalorder 1, %s25
      %p266 = scmp.lt.s32.totalorder %s25, 3
      %p267 = pnand %p265, %p266
      %p268 = pneg %p267
      // Predicated region
      $region33: #{tpu_custom_call.1} parent=5 // pred_check
        _
      $region34: #{tpu_custom_call.1} parent=5 // pred_check_branch
        %270 = sbr.rel (%p267) target = $region36
      $region35: #{tpu_custom_call.1} parent=5 // pred_region
        %s271 = ssub.s32 %s25, 1
        %s272 = sand.u32 %s50, 1
        %s273 = scalar_lea.sflag [#allocation6], %s272
        %s274 = sand.u32 %s50, 1
        %s275 = smul.addr %s274, 32
        %s276 = scalar_lea.vmem [#allocation5], %s275
        // Predicated region
        $region37: #{tpu_custom_call.1} parent=35 // pred_check
          %p277 = pneg %p63
        $region38: #{tpu_custom_call.1} parent=35 // pred_check_branch
          %279 = sbr.rel (%p277) target = $region40
        $region39: #{tpu_custom_call.1} parent=35 // pred_region
          %280 = dma.done %s273, 512
        $region40: #{tpu_custom_call.1} parent=35 // pred_fallthru
          _
        %s281 = sand.u32 %s78, 1
        %s282 = scalar_lea.sflag [#allocation8], %s281
        %s283 = sand.u32 %s78, 1
        %s284 = smul.addr %s283, 16
        %s285 = scalar_lea.vmem [#allocation7], %s284
        // Predicated region
        $region41: #{tpu_custom_call.1} parent=35 // pred_check
          %p286 = pneg %p91
        $region42: #{tpu_custom_call.1} parent=35 // pred_check_branch
          %288 = sbr.rel (%p286) target = $region44
        $region43: #{tpu_custom_call.1} parent=35 // pred_region
          %289 = dma.done %s282, 256
        $region44: #{tpu_custom_call.1} parent=35 // pred_fallthru
          _
        %s290 = sand.u32 %s50, 1
        %s291 = scalar_lea.sflag [#allocation6], %s290
        %s292 = sand.u32 %s50, 1
        %s293 = smul.addr %s292, 32
        %s294 = scalar_lea.vmem [#allocation5], %s293
        %p295 = pneg %p63
        %p296 = pneg %p60
        %s297 = sand.u32 %s78, 1
        %s298 = scalar_lea.sflag [#allocation8], %s297
        %s299 = sand.u32 %s78, 1
        %s300 = smul.addr %s299, 16
        %s301 = scalar_lea.vmem [#allocation7], %s300
        %p302 = pneg %p91
        %p303 = pneg %p88
        %s304 = smul.u32 2, %s35
        %p305 = scmp.lt.s32.totalorder %s304, 1
        %s306 = scalar_select %p305, %s304, 1
        %s307 = smul.addr %s306, 8
        %s308 = scalar_lea.vmem %s3, %s307
        %p309 = pneg %p117
        %p310 = pneg %p114
        %p311 = pneg %p138
        %p312 = pneg %p135
        %p313 = pneg %p164
        %p314 = pneg %p161
        %p315 = scmp.lt.s32.totalorder %s34, 1
        %s316 = scalar_select %p315, %s34, 1
        %s317 = scalar_lea.vmem %s5, %s316
        %p318 = pneg %p190
        %p319 = pneg %p187
        %p320 = scmp.lt.s32.totalorder %s34, 1
        %s321 = scalar_select %p320, %s34, 1
        %s322 = scalar_lea.vmem %s6, %s321
        %s323 = smul.u32 2, %s35
        %s324 = smul.u32 2, %s35
        %p325 = scmp.lt.s32.totalorder %s324, 1
        %s326 = scalar_select %p325, %s324, 1
        %s327 = smul.addr %s326, 8
        %s328 = scalar_lea.vmem %s3, %s327
        %s329 = smul.u32 2, %s35
        %p330 = scmp.lt.s32.totalorder %s34, 1
        %s331 = scalar_select %p330, %s34, 1
        %s332 = scalar_lea.vmem %s5, %s331
        %p333 = scmp.lt.s32.totalorder %s34, 1
        %s334 = scalar_select %p333, %s34, 1
        %s335 = scalar_lea.vmem %s6, %s334
        %p336 = scmp.eq.s32.totalorder %s35, 0
        // Predicated region
        $region45: #{tpu_custom_call.1} parent=35 // pred_check
          %p337 = pneg %p336
        $region46: #{tpu_custom_call.1} parent=35 // pred_check_branch
          %339 = sbr.rel (%p337) target = $region48
        $region47: #{tpu_custom_call.1} parent=35 // pred_region
          %vm340 = vcmask 0
          %341 = vst.msk [vmem:[%s332] sm:$0x1] %vm340, 0.0
          %342 = vst.msk [vmem:[%s335] sm:$0x1] %vm340, 0.0
          %v343 = vld [vmem:[%s276] sm:$0xff]
          %v344 = vld [vmem:[%s276 + $0x8] sm:$0xff]
          %v345 = vld [vmem:[%s276 + $0x10] sm:$0xff]
          %v346 = vld [vmem:[%s276 + $0x18] sm:$0xff]
          %v347 = vld [vmem:[%s4] sm:$0xff]
          %vm348 = vcmask 64512
          %v350 = vsel %vm348, %v343, 0
          %v353 = vsel %vm348, %v344, 0
          %v356 = vsel %vm348, %v345, 0
          %v359 = vsel %vm348, %v346, 0
          %361 = vmatprep.subr.mxu0 0.0
          %362 = vmatpush1.msra.mxu0 0.0
          %363 = vmatprep.subr.mxu0 0.0
          %364 = vmatpush1.msra.mxu0 0.0
          %365 = vmatprep.subr.mxu0 0.0
          %366 = vmatpush1.msra.mxu0 0.0
          %367 = vmatprep.subr.mxu0 0.0
          %368 = vmatpush1.msra.mxu0 0.0
          %369 = vmatprep.subr.mxu0 0.0
          %370 = vmatpush1.msra.mxu0 0.0
          %371 = vmatprep.subr.mxu0 0.0
          %372 = vmatpush1.msra.mxu0 0.0
          %373 = vmatprep.subr.mxu0 0.0
          %374 = vmatpush1.msra.mxu0 0.0
          %375 = vmatprep.subr.mxu0 0.0
          %376 = vmatpush1.msra.mxu0 0.0
          %377 = vmatprep.subr.mxu0 0.0
          %378 = vmatpush1.msra.mxu0 0.0
          %379 = vmatprep.subr.mxu0 0.0
          %380 = vmatpush1.msra.mxu0 0.0
          %381 = vmatprep.subr.mxu0 0.0
          %382 = vmatpush1.msra.mxu0 0.0
          %383 = vmatprep.subr.mxu0 0.0
          %384 = vmatpush1.msra.mxu0 0.0
          %385 = vmatprep.subr.mxu0 0.0
          %386 = vmatpush1.msra.mxu0 0.0
          %387 = vmatprep.subr.mxu0 0.0
          %388 = vmatpush1.msra.mxu0 0.0
          %389 = vmatprep.subr.mxu0 0.0
          %390 = vmatpush1.msra.mxu0 0.0
          %391 = vmatprep.subr.mxu0 0.0
          %392 = vmatpush1.msra.mxu0 %v347
          %393 = vmatprep.subr.mxu0 0.0
          %394 = vmatpush2.msra.mxu0 0.0
          %395 = vmatprep.subr.mxu0 0.0
          %396 = vmatpush2.msra.mxu0 0.0
          %397 = vmatprep.subr.mxu0 0.0
          %398 = vmatpush2.msra.mxu0 0.0
          %399 = vmatprep.subr.mxu0 0.0
          %400 = vmatpush2.msra.mxu0 0.0
          %401 = vmatprep.subr.mxu0 0.0
          %402 = vmatpush2.msra.mxu0 0.0
          %403 = vmatprep.subr.mxu0 0.0
          %404 = vmatpush2.msra.mxu0 0.0
          %405 = vmatprep.subr.mxu0 0.0
          %406 = vmatpush2.msra.mxu0 0.0
          %407 = vmatprep.subr.mxu0 0.0
          %408 = vmatpush2.msra.mxu0 0.0
          %409 = vmatprep.subr.mxu0 0.0
          %410 = vmatpush2.msra.mxu0 0.0
          %411 = vmatprep.subr.mxu0 0.0
          %412 = vmatpush2.msra.mxu0 0.0
          %413 = vmatprep.subr.mxu0 0.0
          %414 = vmatpush2.msra.mxu0 0.0
          %415 = vmatprep.subr.mxu0 0.0
          %416 = vmatpush2.msra.mxu0 0.0
          %417 = vmatprep.subr.mxu0 0.0
          %418 = vmatpush2.msra.mxu0 0.0
          %419 = vmatprep.subr.mxu0 0.0
          %420 = vmatpush2.msra.mxu0 0.0
          %421 = vmatprep.subr.mxu0 0.0
          %422 = vmatpush2.msra.mxu0 0.0
          %423 = vmatprep.subr.mxu0 0.0
          %424 = vmatpush2.msra.mxu0 0.0
          %425 = vmatprep.mubr.f32.mxu0 0.0
          %426 = vmatmul.mubr.f32.gmra.mxu0 %v350
          %v427 = vpop.f32.mrf.mxu0
          %v428 = vadd.f32 0.0, %v427
          %v429 = vpop.f32.mrf.mxu0
          %430 = vmatprep.mubr.f32.mxu0 0.0
          %431 = vmatmul.mubr.f32.gmra.mxu0 %v353
          %v432 = vpop.f32.mrf.mxu0
          %v433 = vadd.f32 0.0, %v432
          %v434 = vpop.f32.mrf.mxu0
          %435 = vmatprep.mubr.f32.mxu0 0.0
          %436 = vmatmul.mubr.f32.gmra.mxu0 %v356
          %v437 = vpop.f32.mrf.mxu0
          %v438 = vadd.f32 0.0, %v437
          %v439 = vpop.f32.mrf.mxu0
          %440 = vmatprep.mubr.f32.mxu0 0.0
          %441 = vmatmul.mubr.f32.gmra.mxu0 %v359
          %v442 = vpop.f32.mrf.mxu0
          %v443 = vadd.f32 0.0, %v442
          %v444 = vpop.f32.mrf.mxu0
          %445 = vdwg.mxu0
          %vm446 = vcmask 130048
          %447 = vst.msk [vmem:[#allocation2] sm:$0xff] %vm446, %v428
          %448 = vst.msk [vmem:[#allocation2 + $0x8] sm:$0xff] %vm446, %v433
          %449 = vst.msk [vmem:[#allocation2 + $0x10] sm:$0xff] %vm446, %v438
          %450 = vst.msk [vmem:[#allocation2 + $0x18] sm:$0xff] %vm446, %v443
        $region48: #{tpu_custom_call.1} parent=35 // pred_fallthru
          _
        %v451 = vld [vmem:[%s328] sm:$0xff]
        %v452 = vld [vmem:[%s328 + $0x8] sm:$0xff]
        %v453 = vld [vmem:[%s285] sm:$0xff]
        %v454 = vld [vmem:[%s285 + $0x8] sm:$0xff]
        %vm455 = vcmp.ne.s32.totalorder %v453, 255
        %vm456 = vcmp.ne.s32.totalorder %v454, 255
        %v457 = vsel %vm455, %v453, 0
        %v458 = vsel %vm456, %v454, 0
        %v459 = vld [vmem:[#allocation2] sm:$0xff]
        %vm460 = vcmask 64512
        %v462 = vsel %vm460, %v451, 0
        %v465 = vsel %vm460, %v452, 0
        %467 = vmatprep.subr.mxu0 0.0
        %468 = vmatpush1.msra.mxu0 0.0
        %469 = vmatprep.subr.mxu0 0.0
        %470 = vmatpush1.msra.mxu0 0.0
        %471 = vmatprep.subr.mxu0 0.0
        %472 = vmatpush1.msra.mxu0 0.0
        %473 = vmatprep.subr.mxu0 0.0
        %474 = vmatpush1.msra.mxu0 0.0
        %475 = vmatprep.subr.mxu0 0.0
        %476 = vmatpush1.msra.mxu0 0.0
        %477 = vmatprep.subr.mxu0 0.0
        %478 = vmatpush1.msra.mxu0 0.0
        %479 = vmatprep.subr.mxu0 0.0
        %480 = vmatpush1.msra.mxu0 0.0
        %481 = vmatprep.subr.mxu0 0.0
        %482 = vmatpush1.msra.mxu0 0.0
        %483 = vmatprep.subr.mxu0 0.0
        %484 = vmatpush1.msra.mxu0 0.0
        %485 = vmatprep.subr.mxu0 0.0
        %486 = vmatpush1.msra.mxu0 0.0
        %487 = vmatprep.subr.mxu0 0.0
        %488 = vmatpush1.msra.mxu0 0.0
        %489 = vmatprep.subr.mxu0 0.0
        %490 = vmatpush1.msra.mxu0 0.0
        %491 = vmatprep.subr.mxu0 0.0
        %492 = vmatpush1.msra.mxu0 0.0
        %493 = vmatprep.subr.mxu0 0.0
        %494 = vmatpush1.msra.mxu0 0.0
        %495 = vmatprep.subr.mxu0 0.0
        %496 = vmatpush1.msra.mxu0 0.0
        %497 = vmatprep.subr.mxu0 0.0
        %498 = vmatpush1.msra.mxu0 %v459
        %499 = vmatprep.subr.mxu0 0.0
        %500 = vmatpush2.msra.mxu0 0.0
        %501 = vmatprep.subr.mxu0 0.0
        %502 = vmatpush2.msra.mxu0 0.0
        %503 = vmatprep.subr.mxu0 0.0
        %504 = vmatpush2.msra.mxu0 0.0
        %505 = vmatprep.subr.mxu0 0.0
        %506 = vmatpush2.msra.mxu0 0.0
        %507 = vmatprep.subr.mxu0 0.0
        %508 = vmatpush2.msra.mxu0 0.0
        %509 = vmatprep.subr.mxu0 0.0
        %510 = vmatpush2.msra.mxu0 0.0
        %511 = vmatprep.subr.mxu0 0.0
        %512 = vmatpush2.msra.mxu0 0.0
        %513 = vmatprep.subr.mxu0 0.0
        %514 = vmatpush2.msra.mxu0 0.0
        %515 = vmatprep.subr.mxu0 0.0
        %516 = vmatpush2.msra.mxu0 0.0
        %517 = vmatprep.subr.mxu0 0.0
        %518 = vmatpush2.msra.mxu0 0.0
        %519 = vmatprep.subr.mxu0 0.0
        %520 = vmatpush2.msra.mxu0 0.0
        %521 = vmatprep.subr.mxu0 0.0
        %522 = vmatpush2.msra.mxu0 0.0
        %523 = vmatprep.subr.mxu0 0.0
        %524 = vmatpush2.msra.mxu0 0.0
        %525 = vmatprep.subr.mxu0 0.0
        %526 = vmatpush2.msra.mxu0 0.0
        %527 = vmatprep.subr.mxu0 0.0
        %528 = vmatpush2.msra.mxu0 0.0
        %529 = vmatprep.subr.mxu0 0.0
        %530 = vmatpush2.msra.mxu0 0.0
        %531 = vmatprep.mubr.f32.mxu0 0.0
        %532 = vmatmul.mubr.f32.gmra.mxu0 %v462
        %v533 = vpop.f32.mrf.mxu0
        %v534 = vadd.f32 0.0, %v533
        %v535 = vpop.f32.mrf.mxu0
        %536 = vmatprep.mubr.f32.mxu0 0.0
        %537 = vmatmul.mubr.f32.gmra.mxu0 %v465
        %v538 = vpop.f32.mrf.mxu0
        %v539 = vadd.f32 0.0, %v538
        %v540 = vpop.f32.mrf.mxu0
        %541 = vdwg.mxu0
        %v542 = vsub.f32 -inf, %v534
        %v543 = vsub.f32 -inf, %v539
        %v544 = vmul.f32 %v542, 1.442695
        %v545 = vpow.pop %v544
        %v546 = vmul.f32 %v543, 1.442695
        %v547 = vpow.pop %v546
        %v548 = vmul.f32 %v545, 0.0
        %v549 = vmul.f32 %v547, 0.0
        %v550 = vsub.f32 %v534, %v534
        %v551 = vsub.f32 %v539, %v539
        %v552 = vmul.f32 %v550, 1.442695
        %v553 = vpow.pop %v552
        %v554 = vmul.f32 %v551, 1.442695
        %v555 = vpow.pop %v554
        %v556 = vadd.f32 %v548, %v553
        %v557 = vadd.f32 %v549, %v555
        %vm558 = vcmp.eq.s32.totalorder %v457, 0
        %vm559 = vcmp.eq.s32.totalorder %v458, 0
        %v560 = vsel %vm558, %v534, 0.0
        %v561 = vsel %vm559, %v539, 0.0
        %s562 = sld [smem:[#allocation4]]
        %v563 = vstv %s562
        %v564 = vsel %vm558, %v563, 0.0
        %v565 = vsel %vm559, %v563, 0.0
        %s566 = scalar_lea.vmem [#allocation2], 8
        %v567 = vld [vmem:[%s566] sm:$0xff]
        %568 = vmatprep.subr.mxu0 0.0
        %569 = vmatpush1.msra.mxu0 0.0
        %570 = vmatprep.subr.mxu0 0.0
        %571 = vmatpush1.msra.mxu0 0.0
        %572 = vmatprep.subr.mxu0 0.0
        %573 = vmatpush1.msra.mxu0 0.0
        %574 = vmatprep.subr.mxu0 0.0
        %575 = vmatpush1.msra.mxu0 0.0
        %576 = vmatprep.subr.mxu0 0.0
        %577 = vmatpush1.msra.mxu0 0.0
        %578 = vmatprep.subr.mxu0 0.0
        %579 = vmatpush1.msra.mxu0 0.0
        %580 = vmatprep.subr.mxu0 0.0
        %581 = vmatpush1.msra.mxu0 0.0
        %582 = vmatprep.subr.mxu0 0.0
        %583 = vmatpush1.msra.mxu0 0.0
        %584 = vmatprep.subr.mxu0 0.0
        %585 = vmatpush1.msra.mxu0 0.0
        %586 = vmatprep.subr.mxu0 0.0
        %587 = vmatpush1.msra.mxu0 0.0
        %588 = vmatprep.subr.mxu0 0.0
        %589 = vmatpush1.msra.mxu0 0.0
        %590 = vmatprep.subr.mxu0 0.0
        %591 = vmatpush1.msra.mxu0 0.0
        %592 = vmatprep.subr.mxu0 0.0
        %593 = vmatpush1.msra.mxu0 0.0
        %594 = vmatprep.subr.mxu0 0.0
        %595 = vmatpush1.msra.mxu0 0.0
        %596 = vmatprep.subr.mxu0 0.0
        %597 = vmatpush1.msra.mxu0 0.0
        %598 = vmatprep.subr.mxu0 0.0
        %599 = vmatpush1.msra.mxu0 %v567
        %600 = vmatprep.subr.mxu0 0.0
        %601 = vmatpush2.msra.mxu0 0.0
        %602 = vmatprep.subr.mxu0 0.0
        %603 = vmatpush2.msra.mxu0 0.0
        %604 = vmatprep.subr.mxu0 0.0
        %605 = vmatpush2.msra.mxu0 0.0
        %606 = vmatprep.subr.mxu0 0.0
        %607 = vmatpush2.msra.mxu0 0.0
        %608 = vmatprep.subr.mxu0 0.0
        %609 = vmatpush2.msra.mxu0 0.0
        %610 = vmatprep.subr.mxu0 0.0
        %611 = vmatpush2.msra.mxu0 0.0
        %612 = vmatprep.subr.mxu0 0.0
        %613 = vmatpush2.msra.mxu0 0.0
        %614 = vmatprep.subr.mxu0 0.0
        %615 = vmatpush2.msra.mxu0 0.0
        %616 = vmatprep.subr.mxu0 0.0
        %617 = vmatpush2.msra.mxu0 0.0
        %618 = vmatprep.subr.mxu0 0.0
        %619 = vmatpush2.msra.mxu0 0.0
        %620 = vmatprep.subr.mxu0 0.0
        %621 = vmatpush2.msra.mxu0 0.0
        %622 = vmatprep.subr.mxu0 0.0
        %623 = vmatpush2.msra.mxu0 0.0
        %624 = vmatprep.subr.mxu0 0.0
        %625 = vmatpush2.msra.mxu0 0.0
        %626 = vmatprep.subr.mxu0 0.0
        %627 = vmatpush2.msra.mxu0 0.0
        %628 = vmatprep.subr.mxu0 0.0
        %629 = vmatpush2.msra.mxu0 0.0
        %630 = vmatprep.subr.mxu0 0.0
        %631 = vmatpush2.msra.mxu0 0.0
        %632 = vmatprep.mubr.f32.mxu0 0.0
        %633 = vmatmul.mubr.f32.gmra.mxu0 %v462
        %v634 = vpop.f32.mrf.mxu0
        %v635 = vadd.f32 0.0, %v634
        %v636 = vpop.f32.mrf.mxu0
        %637 = vmatprep.mubr.f32.mxu0 0.0
        %638 = vmatmul.mubr.f32.gmra.mxu0 %v465
        %v639 = vpop.f32.mrf.mxu0
        %v640 = vadd.f32 0.0, %v639
        %v641 = vpop.f32.mrf.mxu0
        %642 = vdwg.mxu0
        %v643 = vmax.f32 %v534, %v635
        %v644 = vmax.f32 %v539, %v640
        %v645 = vsub.f32 %v534, %v643
        %v646 = vsub.f32 %v539, %v644
        %v647 = vmul.f32 %v645, 1.442695
        %v648 = vpow.pop %v647
        %v649 = vmul.f32 %v646, 1.442695
        %v650 = vpow.pop %v649
        %v651 = vmul.f32 %v648, %v556
        %v652 = vmul.f32 %v650, %v557
        %v653 = vsub.f32 %v635, %v643
        %v654 = vsub.f32 %v640, %v644
        %v655 = vmul.f32 %v653, 1.442695
        %v656 = vpow.pop %v655
        %v657 = vmul.f32 %v654, 1.442695
        %v658 = vpow.pop %v657
        %v659 = vadd.f32 %v651, %v656
        %v660 = vadd.f32 %v652, %v658
        %vm661 = vcmp.eq.s32.totalorder %v457, 1
        %vm662 = vcmp.eq.s32.totalorder %v458, 1
        %v663 = vsel %vm661, %v635, %v560
        %v664 = vsel %vm662, %v640, %v561
        %s665 = sld [smem:[#allocation4 + $0x1]]
        %v666 = vstv %s665
        %v667 = vsel %vm661, %v666, %v564
        %v668 = vsel %vm662, %v666, %v565
        %s669 = scalar_lea.vmem [#allocation2], 16
        %v670 = vld [vmem:[%s669] sm:$0xff]
        %671 = vmatprep.subr.mxu0 0.0
        %672 = vmatpush1.msra.mxu0 0.0
        %673 = vmatprep.subr.mxu0 0.0
        %674 = vmatpush1.msra.mxu0 0.0
        %675 = vmatprep.subr.mxu0 0.0
        %676 = vmatpush1.msra.mxu0 0.0
        %677 = vmatprep.subr.mxu0 0.0
        %678 = vmatpush1.msra.mxu0 0.0
        %679 = vmatprep.subr.mxu0 0.0
        %680 = vmatpush1.msra.mxu0 0.0
        %681 = vmatprep.subr.mxu0 0.0
        %682 = vmatpush1.msra.mxu0 0.0
        %683 = vmatprep.subr.mxu0 0.0
        %684 = vmatpush1.msra.mxu0 0.0
        %685 = vmatprep.subr.mxu0 0.0
        %686 = vmatpush1.msra.mxu0 0.0
        %687 = vmatprep.subr.mxu0 0.0
        %688 = vmatpush1.msra.mxu0 0.0
        %689 = vmatprep.subr.mxu0 0.0
        %690 = vmatpush1.msra.mxu0 0.0
        %691 = vmatprep.subr.mxu0 0.0
        %692 = vmatpush1.msra.mxu0 0.0
        %693 = vmatprep.subr.mxu0 0.0
        %694 = vmatpush1.msra.mxu0 0.0
        %695 = vmatprep.subr.mxu0 0.0
        %696 = vmatpush1.msra.mxu0 0.0
        %697 = vmatprep.subr.mxu0 0.0
        %698 = vmatpush1.msra.mxu0 0.0
        %699 = vmatprep.subr.mxu0 0.0
        %700 = vmatpush1.msra.mxu0 0.0
        %701 = vmatprep.subr.mxu0 0.0
        %702 = vmatpush1.msra.mxu0 %v670
        %703 = vmatprep.subr.mxu0 0.0
        %704 = vmatpush2.msra.mxu0 0.0
        %705 = vmatprep.subr.mxu0 0.0
        %706 = vmatpush2.msra.mxu0 0.0
        %707 = vmatprep.subr.mxu0 0.0
        %708 = vmatpush2.msra.mxu0 0.0
        %709 = vmatprep.subr.mxu0 0.0
        %710 = vmatpush2.msra.mxu0 0.0
        %711 = vmatprep.subr.mxu0 0.0
        %712 = vmatpush2.msra.mxu0 0.0
        %713 = vmatprep.subr.mxu0 0.0
        %714 = vmatpush2.msra.mxu0 0.0
        %715 = vmatprep.subr.mxu0 0.0
        %716 = vmatpush2.msra.mxu0 0.0
        %717 = vmatprep.subr.mxu0 0.0
        %718 = vmatpush2.msra.mxu0 0.0
        %719 = vmatprep.subr.mxu0 0.0
        %720 = vmatpush2.msra.mxu0 0.0
        %721 = vmatprep.subr.mxu0 0.0
        %722 = vmatpush2.msra.mxu0 0.0
        %723 = vmatprep.subr.mxu0 0.0
        %724 = vmatpush2.msra.mxu0 0.0
        %725 = vmatprep.subr.mxu0 0.0
        %726 = vmatpush2.msra.mxu0 0.0
        %727 = vmatprep.subr.mxu0 0.0
        %728 = vmatpush2.msra.mxu0 0.0
        %729 = vmatprep.subr.mxu0 0.0
        %730 = vmatpush2.msra.mxu0 0.0
        %731 = vmatprep.subr.mxu0 0.0
        %732 = vmatpush2.msra.mxu0 0.0
        %733 = vmatprep.subr.mxu0 0.0
        %734 = vmatpush2.msra.mxu0 0.0
        %735 = vmatprep.mubr.f32.mxu0 0.0
        %736 = vmatmul.mubr.f32.gmra.mxu0 %v462
        %v737 = vpop.f32.mrf.mxu0
        %v738 = vadd.f32 0.0, %v737
        %v739 = vpop.f32.mrf.mxu0
        %740 = vmatprep.mubr.f32.mxu0 0.0
        %741 = vmatmul.mubr.f32.gmra.mxu0 %v465
        %v742 = vpop.f32.mrf.mxu0
        %v743 = vadd.f32 0.0, %v742
        %v744 = vpop.f32.mrf.mxu0
        %745 = vdwg.mxu0
        %v746 = vmax.f32 %v643, %v738
        %v747 = vmax.f32 %v644, %v743
        %v748 = vsub.f32 %v643, %v746
        %v749 = vsub.f32 %v644, %v747
        %v750 = vmul.f32 %v748, 1.442695
        %v751 = vpow.pop %v750
        %v752 = vmul.f32 %v749, 1.442695
        %v753 = vpow.pop %v752
        %v754 = vmul.f32 %v751, %v659
        %v755 = vmul.f32 %v753, %v660
        %v756 = vsub.f32 %v738, %v746
        %v757 = vsub.f32 %v743, %v747
        %v758 = vmul.f32 %v756, 1.442695
        %v759 = vpow.pop %v758
        %v760 = vmul.f32 %v757, 1.442695
        %v761 = vpow.pop %v760
        %v762 = vadd.f32 %v754, %v759
        %v763 = vadd.f32 %v755, %v761
        %vm764 = vcmp.eq.s32.totalorder %v457, 2
        %vm765 = vcmp.eq.s32.totalorder %v458, 2
        %v766 = vsel %vm764, %v738, %v663
        %v767 = vsel %vm765, %v743, %v664
        %s768 = sld [smem:[#allocation4 + $0x2]]
        %v769 = vstv %s768
        %v770 = vsel %vm764, %v769, %v667
        %v771 = vsel %vm765, %v769, %v668
        %s772 = scalar_lea.vmem [#allocation2], 24
        %v773 = vld [vmem:[%s772] sm:$0xff]
        %774 = vmatprep.subr.mxu0 0.0
        %775 = vmatpush1.msra.mxu0 0.0
        %776 = vmatprep.subr.mxu0 0.0
        %777 = vmatpush1.msra.mxu0 0.0
        %778 = vmatprep.subr.mxu0 0.0
        %779 = vmatpush1.msra.mxu0 0.0
        %780 = vmatprep.subr.mxu0 0.0
        %781 = vmatpush1.msra.mxu0 0.0
        %782 = vmatprep.subr.mxu0 0.0
        %783 = vmatpush1.msra.mxu0 0.0
        %784 = vmatprep.subr.mxu0 0.0
        %785 = vmatpush1.msra.mxu0 0.0
        %786 = vmatprep.subr.mxu0 0.0
        %787 = vmatpush1.msra.mxu0 0.0
        %788 = vmatprep.subr.mxu0 0.0
        %789 = vmatpush1.msra.mxu0 0.0
        %790 = vmatprep.subr.mxu0 0.0
        %791 = vmatpush1.msra.mxu0 0.0
        %792 = vmatprep.subr.mxu0 0.0
        %793 = vmatpush1.msra.mxu0 0.0
        %794 = vmatprep.subr.mxu0 0.0
        %795 = vmatpush1.msra.mxu0 0.0
        %796 = vmatprep.subr.mxu0 0.0
        %797 = vmatpush1.msra.mxu0 0.0
        %798 = vmatprep.subr.mxu0 0.0
        %799 = vmatpush1.msra.mxu0 0.0
        %800 = vmatprep.subr.mxu0 0.0
        %801 = vmatpush1.msra.mxu0 0.0
        %802 = vmatprep.subr.mxu0 0.0
        %803 = vmatpush1.msra.mxu0 0.0
        %804 = vmatprep.subr.mxu0 0.0
        %805 = vmatpush1.msra.mxu0 %v773
        %806 = vmatprep.subr.mxu0 0.0
        %807 = vmatpush2.msra.mxu0 0.0
        %808 = vmatprep.subr.mxu0 0.0
        %809 = vmatpush2.msra.mxu0 0.0
        %810 = vmatprep.subr.mxu0 0.0
        %811 = vmatpush2.msra.mxu0 0.0
        %812 = vmatprep.subr.mxu0 0.0
        %813 = vmatpush2.msra.mxu0 0.0
        %814 = vmatprep.subr.mxu0 0.0
        %815 = vmatpush2.msra.mxu0 0.0
        %816 = vmatprep.subr.mxu0 0.0
        %817 = vmatpush2.msra.mxu0 0.0
        %818 = vmatprep.subr.mxu0 0.0
        %819 = vmatpush2.msra.mxu0 0.0
        %820 = vmatprep.subr.mxu0 0.0
        %821 = vmatpush2.msra.mxu0 0.0
        %822 = vmatprep.subr.mxu0 0.0
        %823 = vmatpush2.msra.mxu0 0.0
        %824 = vmatprep.subr.mxu0 0.0
        %825 = vmatpush2.msra.mxu0 0.0
        %826 = vmatprep.subr.mxu0 0.0
        %827 = vmatpush2.msra.mxu0 0.0
        %828 = vmatprep.subr.mxu0 0.0
        %829 = vmatpush2.msra.mxu0 0.0
        %830 = vmatprep.subr.mxu0 0.0
        %831 = vmatpush2.msra.mxu0 0.0
        %832 = vmatprep.subr.mxu0 0.0
        %833 = vmatpush2.msra.mxu0 0.0
        %834 = vmatprep.subr.mxu0 0.0
        %835 = vmatpush2.msra.mxu0 0.0
        %836 = vmatprep.subr.mxu0 0.0
        %837 = vmatpush2.msra.mxu0 0.0
        %838 = vmatprep.mubr.f32.mxu0 0.0
        %839 = vmatmul.mubr.f32.gmra.mxu0 %v462
        %v840 = vpop.f32.mrf.mxu0
        %v841 = vadd.f32 0.0, %v840
        %v842 = vpop.f32.mrf.mxu0
        %843 = vmatprep.mubr.f32.mxu0 0.0
        %844 = vmatmul.mubr.f32.gmra.mxu0 %v465
        %v845 = vpop.f32.mrf.mxu0
        %v846 = vadd.f32 0.0, %v845
        %v847 = vpop.f32.mrf.mxu0
        %848 = vdwg.mxu0
        %v849 = vmax.f32 %v746, %v841
        %v850 = vmax.f32 %v747, %v846
        %v851 = vsub.f32 %v746, %v849
        %v852 = vsub.f32 %v747, %v850
        %v853 = vmul.f32 %v851, 1.442695
        %v854 = vpow.pop %v853
        %v855 = vmul.f32 %v852, 1.442695
        %v856 = vpow.pop %v855
        %v857 = vmul.f32 %v854, %v762
        %v858 = vmul.f32 %v856, %v763
        %v859 = vsub.f32 %v841, %v849
        %v860 = vsub.f32 %v846, %v850
        %v861 = vmul.f32 %v859, 1.442695
        %v862 = vpow.pop %v861
        %v863 = vmul.f32 %v860, 1.442695
        %v864 = vpow.pop %v863
        %v865 = vadd.f32 %v857, %v862
        %v866 = vadd.f32 %v858, %v864
        %vm867 = vcmp.eq.s32.totalorder %v457, 3
        %vm868 = vcmp.eq.s32.totalorder %v458, 3
        %v869 = vsel %vm867, %v841, %v766
        %v870 = vsel %vm868, %v846, %v767
        %s871 = sld [smem:[#allocation4 + $0x3]]
        %v872 = vstv %s871
        %v873 = vsel %vm867, %v872, %v770
        %v874 = vsel %vm868, %v872, %v771
        %v875 = vlog2.pop %v865
        %v876 = vmul.f32 %v875, 0.6931472
        %v877 = vlog2.pop %v866
        %v878 = vmul.f32 %v877, 0.6931472
        %v879 = vadd.f32 %v849, %v876
        %v880 = vadd.f32 %v850, %v878
        %v881 = vsel %vm455, 1, 0
        %v882 = vsel %vm456, 1, 0
        %v883 = vcvt.s32.f32 %v881
        %v884 = vcvt.s32.f32 %v882
        %v885 = vsub.f32 %v879, %v869
        %v886 = vsub.f32 %v880, %v870
        %v887 = vmul.f32 %v873, %v885
        %v888 = vmul.f32 %v874, %v886
        %v889 = vmul.f32 %v887, %v883
        %v890 = vmul.f32 %v888, %v884
        %v891 = vld [vmem:[%s332] sm:$0x1]
        %vm892 = vcmask 130048
        %v893 = vsel %vm892, %v889, 0.0
        %v894 = vsel %vm892, %v890, 0.0
        %v895 = vadd.f32 %v893, %v894
        %896 = vadd.xlane.f32.xlu0 %v895
        %v897 = vpop.xlane.xlu0 %896
        %v898 = vrot.slane %v897, 4
        %v899 = vadd.f32 %v897, %v898
        %v900 = vrot.slane %v899, 2
        %v901 = vadd.f32 %v899, %v900
        %v902 = vrot.slane %v901, 1
        %v903 = vadd.f32 %v901, %v902
        %s904 = vtos %v903
        %v905 = vstv %s904
        %v906 = vadd.f32 %v891, %v905
        %vm907 = vcmask 0
        %908 = vst.msk [vmem:[%s332] sm:$0x1] %vm907, %v906
        %v909 = vld [vmem:[%s335] sm:$0x1]
        %v910 = vsel %vm892, %v883, 0.0
        %v911 = vsel %vm892, %v884, 0.0
        %v912 = vadd.f32 %v910, %v911
        %913 = vadd.xlane.f32.xlu0 %v912
        %v914 = vpop.xlane.xlu0 %913
        %v915 = vrot.slane %v914, 4
        %v916 = vadd.f32 %v914, %v915
        %v917 = vrot.slane %v916, 2
        %v918 = vadd.f32 %v916, %v917
        %v919 = vrot.slane %v918, 1
        %v920 = vadd.f32 %v918, %v919
        %s921 = vtos %v920
        %v922 = vstv %s921
        %v923 = vadd.f32 %v909, %v922
        %924 = vst.msk [vmem:[%s335] sm:$0x1] %vm907, %v923
        %p925 = scmp.lt.s32.totalorder %s34, 1
        %s926 = scalar_select %p925, %s34, 1
        %s927 = scalar_lea.vmem %s5, %s926
        %p928 = scmp.lt.s32.totalorder %s34, 1
        %s929 = scalar_select %p928, %s34, 1
        %s930 = scalar_lea.vmem %s6, %s929
        // Predicated region
        $region49: #{tpu_custom_call.1} parent=35 // pred_check
          %p931 = pneg %p161
        $region50: #{tpu_custom_call.1} parent=35 // pred_check_branch
          %933 = sbr.rel (%p931) target = $region52
        $region51: #{tpu_custom_call.1} parent=35 // pred_region
          _
        $region52: #{tpu_custom_call.1} parent=35 // pred_fallthru
          _
        // Predicated region
        $region53: #{tpu_custom_call.1} parent=35 // pred_check
          %p934 = pneg %p187
        $region54: #{tpu_custom_call.1} parent=35 // pred_check_branch
          %936 = sbr.rel (%p934) target = $region56
        $region55: #{tpu_custom_call.1} parent=35 // pred_region
          _
        $region56: #{tpu_custom_call.1} parent=35 // pred_fallthru
          _
      $region36: #{tpu_custom_call.1} parent=5 // pred_fallthru
        _
      %p937 = scmp.le.s32.totalorder 2, %s25
      // Predicated region
      $region57: #{tpu_custom_call.1} parent=5 // pred_check
        %p938 = pneg %p937
      $region58: #{tpu_custom_call.1} parent=5 // pred_check_branch
        %940 = sbr.rel (%p938) target = $region60
      $region59: #{tpu_custom_call.1} parent=5 // pred_region
        %s941 = ssub.s32 %s25, 2
        // Predicated region
        $region61: #{tpu_custom_call.1} parent=59 // pred_check
          %p942 = pneg %p167
        $region62: #{tpu_custom_call.1} parent=59 // pred_check_branch
          %944 = sbr.rel (%p942) target = $region64
        $region63: #{tpu_custom_call.1} parent=59 // pred_region
          %p945 = scmp.lt.s32.totalorder %s36, 1
          %s946 = scalar_select %p945, %s36, 1
          %s947 = scalar_lea.vmem %s5, %s946
        $region64: #{tpu_custom_call.1} parent=59 // pred_fallthru
          _
        // Predicated region
        $region65: #{tpu_custom_call.1} parent=59 // pred_check
          %p948 = pneg %p193
        $region66: #{tpu_custom_call.1} parent=59 // pred_check_branch
          %950 = sbr.rel (%p948) target = $region68
        $region67: #{tpu_custom_call.1} parent=59 // pred_region
          %p951 = scmp.lt.s32.totalorder %s36, 1
          %s952 = scalar_select %p951, %s36, 1
          %s953 = scalar_lea.vmem %s6, %s952
        $region68: #{tpu_custom_call.1} parent=59 // pred_fallthru
          _
      $region60: #{tpu_custom_call.1} parent=5 // pred_fallthru
        _
    $region6: #{tpu_custom_call.1} parent=1 // loop_footer
      %s29 = sadd.s32 1, %s25
    $region7: #{tpu_custom_call.1} parent=1 // loop_footer_branch
      %24 = sbr.rel target = $region3
    $region8: #{tpu_custom_call.1} parent=1 // loop_exit
      _
    %954 = vsyncpa [#allocation6], 1
    %s955 = scalar_lea.sflag [#allocation6], 1
    %956 = vsyncpa %s955, 1
    %957 = vsyncpa [#allocation8], 1
    %s958 = scalar_lea.sflag [#allocation8], 1
    %959 = vsyncpa %s958, 1

</llo_original>
